<compile_context>
chip_gen: v7x
topology: tpu7x:2x2x1
jax: 0.10.0
libtpu: 0.0.40
codegen_flags: <defaults>
</compile_context>

<pallas_src>
import functools

import jax
import jax.numpy as jnp
from jax.experimental import pallas as pl
from jax.experimental.pallas import tpu as pltpu


def textcnn_kernel(ids_ref, table_ref, wc_ref, bc_ref, wf_ref, bf_ref, out_ref, *,
                   batch, ksize, l_out):
    """Fully fused TextCNN forward (everything fits VMEM at these sizes).

    ids_ref:   [L*B, 1]       time-major token ids (row = t*B + b), int32
    table_ref: [V_pad, D_pad] zero-padded embedding table, bf16
    wc_ref:    [K*D_pad, F]   conv weight, tap-stacked along contraction, bf16
    bc_ref:    [1, F]         conv bias, f32
    wf_ref:    [F, C_pad]     fc weight (pre-transposed, lane-padded), bf16
    bf_ref:    [1, C_pad]     fc bias (lane-padded), f32
    out_ref:   [B, C_pad]     lane-dense logits, f32
    """
    rows = l_out * batch
    v_pad = table_ref.shape[0]

    # --- In-kernel embedding gather as a one-hot MXU matmul (exact row select).
    ids = ids_ref[...]                                                # [L*B, 1] i32
    vocab_iota = jax.lax.broadcasted_iota(jnp.int32, (ids.shape[0], v_pad), 1)
    onehot = (vocab_iota == ids).astype(jnp.bfloat16)                 # [L*B, V_pad]
    emb = jnp.dot(onehot, table_ref[...],
                  preferred_element_type=jnp.float32)                 # [L*B, D_pad] f32

    # --- Conv: fold the K taps into one 384-deep contraction.  In the time-major
    # layout, tap k needs rows [k*B, k*B + L_out*B) (8-sublane aligned f32 slices);
    # concatenating the K slices along lanes (offsets 0/128/256, tile-aligned)
    # yields a single MXU matmul with no f32 zeros init / accumulate adds.
    lhs = jnp.concatenate(
        [emb[k * batch:k * batch + rows, :] for k in range(ksize)], axis=1
    ).astype(jnp.bfloat16)                                            # [L_out*B, K*128]
    conv = jnp.dot(lhs, wc_ref[...],
                   preferred_element_type=jnp.float32)                # [L_out*B, F] f32

    # --- Max-pool over time (tree-reduced), done BEFORE bias+ReLU.
    # Exact: bias is per-filter (constant over t) and ReLU is monotonic, so
    # max_t relu(x_t + b) == relu(max_t(x_t) + b).
    slices = [conv[t * batch:(t + 1) * batch, :] for t in range(l_out)]
    while len(slices) > 1:
        nxt = [jnp.maximum(slices[i], slices[i + 1])
               for i in range(0, len(slices) - 1, 2)]
        if len(slices) % 2:
            nxt.append(slices[-1])
        slices = nxt
    pooled = jnp.maximum(slices[0] + bc_ref[...], 0.0)                # [B, F] f32

    # --- Dropout is identity at inference.  Lane-dense classifier output.
    out_ref[...] = (
        jnp.dot(pooled.astype(jnp.bfloat16), wf_ref[...],
                preferred_element_type=jnp.float32)
        + bf_ref[...]
    )


def prepare_textcnn_params(emb_table, conv_w, conv_b, fc_w, fc_b,
                           *, d_pad=128, c_pad=128):
    """One-time weight prep (hoisted out of the per-call path)."""
    vocab, d = emb_table.shape
    f_, _, k, _ = conv_w.shape
    c = fc_w.shape[0]
    assert d <= d_pad and c <= c_pad
    v_pad = ((vocab + 127) // 128) * 128

    table = jnp.zeros((v_pad, d_pad), jnp.bfloat16)
    table = table.at[:vocab, :d].set(emb_table.astype(jnp.bfloat16))

    wc = jnp.transpose(conv_w[:, 0], (1, 2, 0))                       # [K, D, F]
    wc = jnp.pad(wc, ((0, 0), (0, d_pad - d), (0, 0)))                # [K, 128, F]
    wc = wc.reshape(k * d_pad, f_).astype(jnp.bfloat16)               # [K*128, F]

    bc = conv_b.reshape(1, f_).astype(jnp.float32)                    # [1, F]

    wf = jnp.zeros((f_, c_pad), jnp.bfloat16)
    wf = wf.at[:, :c].set(fc_w.T.astype(jnp.bfloat16))                # [F, 128]
    bf = jnp.zeros((1, c_pad), jnp.float32).at[0, :c].set(fc_b)       # [1, 128]

    return {"table": table, "wc": wc, "bc": bc, "wf": wf, "bf": bf}


@functools.partial(jax.jit, static_argnames=("n_class",))
def textcnn_forward(tokens, params, *, n_class):
    """tokens: int32 [B, L]; returns logits float32 [B, n_class]."""
    B, L = tokens.shape
    d_pad = params["table"].shape[1]
    K = params["wc"].shape[0] // d_pad
    c_pad = params["wf"].shape[1]
    L_out = L - K + 1

    # Alignment assumptions (sublane-aligned slices inside the kernel).
    assert B % 8 == 0, "batch must be a multiple of 8 (sublanes)"
    assert (L_out * B) % 8 == 0

    # Time-major token ids (row = t*B + b); 512 B — the only per-call glue op.
    ids_tm = tokens.T.reshape(L * B, 1).astype(jnp.int32)

    kernel = functools.partial(textcnn_kernel, batch=B, ksize=K, l_out=L_out)
    vmem = pl.BlockSpec(memory_space=pltpu.MemorySpace.VMEM)
    # TODO(synk): at real vocab (58954) / seq / batch sizes, replace the one-hot
    # gather with a DMA row-gather of the HBM table and add a batch/row grid with
    # dimension_semantics=("parallel",) sized against v7x's 64 MiB VMEM so both
    # TensorCores are used.
    out_pad = pl.pallas_call(
        kernel,
        out_shape=jax.ShapeDtypeStruct((B, c_pad), jnp.float32),
        in_specs=[vmem, vmem, vmem, vmem, vmem, vmem],
        out_specs=vmem,
    )(ids_tm, params["table"], params["wc"], params["bc"],
      params["wf"], params["bf"])
    return out_pad[:, :n_class]


def textcnn_reference(tokens, emb_table, conv_w, conv_b, fc_w, fc_b):
    """Pure-JAX f32 reference matching the PyTorch forward (eval mode)."""
    emb = emb_table[tokens]                        # [B, L, D]
    B, L, D = emb.shape
    F_, _, K, _ = conv_w.shape
    L_out = L - K + 1
    conv = jnp.stack(
        [jnp.einsum('bkd,fkd->bf', emb[:, t:t + K, :], conv_w[:, 0])
         for t in range(L_out)], axis=2) + conv_b[None, :, None]     # [B, F, L_out]
    h = jnp.maximum(conv, 0.0)
    pooled = jnp.max(h, axis=2)                    # [B, F]
    return pooled @ fc_w.T + fc_b                  # [B, C]


if __name__ == "__main__":
    # Module-consistent shapes: embedding_dim=50, kernel_size=3, num_filters=256,
    # n_class=2, with a small vocab / batch / sequence for the demo.
    VOCAB, D, K, F_, C = 300, 50, 3, 256, 2
    B, L = 8, 16   # B multiple of 8 (sublanes); L_out*B = 112

    key = jax.random.PRNGKey(0)
    k1, k2, k3, k4, k5, k6 = jax.random.split(key, 6)
    emb_table = jax.random.normal(k1, (VOCAB, D), jnp.float32) * 0.1
    conv_w = jax.random.normal(k2, (F_, 1, K, D), jnp.float32) * 0.05
    conv_b = jax.random.normal(k3, (F_,), jnp.float32) * 0.01
    fc_w = jax.random.normal(k4, (C, F_), jnp.float32) * 0.05
    fc_b = jax.random.normal(k5, (C,), jnp.float32) * 0.01
    tokens = jax.random.randint(k6, (B, L), 0, VOCAB, dtype=jnp.int32)

    params = prepare_textcnn_params(emb_table, conv_w, conv_b, fc_w, fc_b)
    params = jax.tree_util.tree_map(jax.block_until_ready, params)  # one-time prep

    out = textcnn_forward(tokens, params, n_class=C)
    out = jax.block_until_ready(out)

    ref = textcnn_reference(tokens, emb_table, conv_w, conv_b, fc_w, fc_b)
    assert out.shape == (B, C), out.shape
    # bf16 table / matmul inputs with f32 accumulation: loose tolerance vs f32 ref.
    assert jnp.allclose(out, ref, atol=1e-2, rtol=1e-2), (out, ref)
    print("KERNEL_OK")
</pallas_src>

<mosaic_0001>
module attributes {stable_mosaic.version = 11 : i64} {
  func.func @textcnn_kernel(%arg0: memref<128x1xi32, #tpu.memory_space<vmem>>, %arg1: memref<384x128xbf16, #tpu.memory_space<vmem>>, %arg2: memref<384x256xbf16, #tpu.memory_space<vmem>>, %arg3: memref<1x256xf32, #tpu.memory_space<vmem>>, %arg4: memref<256x128xbf16, #tpu.memory_space<vmem>>, %arg5: memref<1x128xf32, #tpu.memory_space<vmem>>, %arg6: memref<8x128xf32, #tpu.memory_space<vmem>>) attributes {dimension_semantics = [], scalar_prefetch = 0 : i64, scratch_operands = 0 : i64, tpu.core_type = #tpu.core_type<tc>} {
    %c0 = arith.constant 0 : index
    %c0_0 = arith.constant 0 : index
    %0 = vector.load %arg0[%c0, %c0_0] : memref<128x1xi32, #tpu.memory_space<vmem>>, vector<128x1xi32>
    %1 = tpu.iota {dimensions = array<i32: 1>} : vector<128x384xi32>
    %2 = vector.broadcast %0 : vector<128x1xi32> to vector<128x384xi32>
    %3 = arith.cmpi eq, %1, %2 : vector<128x384xi32>
    %4 = arith.extui %3 : vector<128x384xi1> to vector<128x384xi32>
    %5 = arith.sitofp %4 : vector<128x384xi32> to vector<128x384xf32>
    %6 = arith.truncf %5 : vector<128x384xf32> to vector<128x384xbf16>
    %c0_1 = arith.constant 0 : index
    %c0_2 = arith.constant 0 : index
    %7 = vector.load %arg1[%c0_1, %c0_2] : memref<384x128xbf16, #tpu.memory_space<vmem>>, vector<384x128xbf16>
    %cst = arith.constant dense<0.000000e+00> : vector<128x128xf32>
    %8 = tpu.matmul %6, %7, %cst {dimension_numbers = #tpu.dot_dimension_numbers<[1], [0], [0], [1], [0, 0, 1, 1], [], []>} : vector<128x384xbf16>, vector<384x128xbf16>, vector<128x128xf32> -> vector<128x128xf32>
    %9 = vector.extract_strided_slice %8 {offsets = [0, 0], sizes = [112, 128], strides = [1, 1]} : vector<128x128xf32> to vector<112x128xf32>
    %10 = vector.extract_strided_slice %8 {offsets = [8, 0], sizes = [112, 128], strides = [1, 1]} : vector<128x128xf32> to vector<112x128xf32>
    %11 = vector.extract_strided_slice %8 {offsets = [16, 0], sizes = [112, 128], strides = [1, 1]} : vector<128x128xf32> to vector<112x128xf32>
    %12 = tpu.concatenate %9, %10, %11 in 1 : vector<112x128xf32>, vector<112x128xf32>, vector<112x128xf32> -> vector<112x384xf32>
    %13 = arith.truncf %12 : vector<112x384xf32> to vector<112x384xbf16>
    %c0_3 = arith.constant 0 : index
    %c0_4 = arith.constant 0 : index
    %14 = vector.load %arg2[%c0_3, %c0_4] : memref<384x256xbf16, #tpu.memory_space<vmem>>, vector<384x256xbf16>
    %cst_5 = arith.constant dense<0.000000e+00> : vector<112x256xf32>
    %15 = tpu.matmul %13, %14, %cst_5 {dimension_numbers = #tpu.dot_dimension_numbers<[1], [0], [0], [1], [0, 0, 1, 1], [], []>} : vector<112x384xbf16>, vector<384x256xbf16>, vector<112x256xf32> -> vector<112x256xf32>
    %16 = vector.extract_strided_slice %15 {offsets = [0, 0], sizes = [8, 256], strides = [1, 1]} : vector<112x256xf32> to vector<8x256xf32>
    %17 = vector.extract_strided_slice %15 {offsets = [8, 0], sizes = [8, 256], strides = [1, 1]} : vector<112x256xf32> to vector<8x256xf32>
    %18 = vector.extract_strided_slice %15 {offsets = [16, 0], sizes = [8, 256], strides = [1, 1]} : vector<112x256xf32> to vector<8x256xf32>
    %19 = vector.extract_strided_slice %15 {offsets = [24, 0], sizes = [8, 256], strides = [1, 1]} : vector<112x256xf32> to vector<8x256xf32>
    %20 = vector.extract_strided_slice %15 {offsets = [32, 0], sizes = [8, 256], strides = [1, 1]} : vector<112x256xf32> to vector<8x256xf32>
    %21 = vector.extract_strided_slice %15 {offsets = [40, 0], sizes = [8, 256], strides = [1, 1]} : vector<112x256xf32> to vector<8x256xf32>
    %22 = vector.extract_strided_slice %15 {offsets = [48, 0], sizes = [8, 256], strides = [1, 1]} : vector<112x256xf32> to vector<8x256xf32>
    %23 = vector.extract_strided_slice %15 {offsets = [56, 0], sizes = [8, 256], strides = [1, 1]} : vector<112x256xf32> to vector<8x256xf32>
    %24 = vector.extract_strided_slice %15 {offsets = [64, 0], sizes = [8, 256], strides = [1, 1]} : vector<112x256xf32> to vector<8x256xf32>
    %25 = vector.extract_strided_slice %15 {offsets = [72, 0], sizes = [8, 256], strides = [1, 1]} : vector<112x256xf32> to vector<8x256xf32>
    %26 = vector.extract_strided_slice %15 {offsets = [80, 0], sizes = [8, 256], strides = [1, 1]} : vector<112x256xf32> to vector<8x256xf32>
    %27 = vector.extract_strided_slice %15 {offsets = [88, 0], sizes = [8, 256], strides = [1, 1]} : vector<112x256xf32> to vector<8x256xf32>
    %28 = vector.extract_strided_slice %15 {offsets = [96, 0], sizes = [8, 256], strides = [1, 1]} : vector<112x256xf32> to vector<8x256xf32>
    %29 = vector.extract_strided_slice %15 {offsets = [104, 0], sizes = [8, 256], strides = [1, 1]} : vector<112x256xf32> to vector<8x256xf32>
    %30 = arith.maximumf %16, %17 : vector<8x256xf32>
    %31 = arith.maximumf %18, %19 : vector<8x256xf32>
    %32 = arith.maximumf %20, %21 : vector<8x256xf32>
    %33 = arith.maximumf %22, %23 : vector<8x256xf32>
    %34 = arith.maximumf %24, %25 : vector<8x256xf32>
    %35 = arith.maximumf %26, %27 : vector<8x256xf32>
    %36 = arith.maximumf %28, %29 : vector<8x256xf32>
    %37 = arith.maximumf %30, %31 : vector<8x256xf32>
    %38 = arith.maximumf %32, %33 : vector<8x256xf32>
    %39 = arith.maximumf %34, %35 : vector<8x256xf32>
    %40 = arith.maximumf %37, %38 : vector<8x256xf32>
    %41 = arith.maximumf %39, %36 : vector<8x256xf32>
    %42 = arith.maximumf %40, %41 : vector<8x256xf32>
    %c0_6 = arith.constant 0 : index
    %c0_7 = arith.constant 0 : index
    %43 = vector.load %arg3[%c0_6, %c0_7] : memref<1x256xf32, #tpu.memory_space<vmem>>, vector<1x256xf32>
    %44 = vector.broadcast %43 : vector<1x256xf32> to vector<8x256xf32>
    %45 = arith.addf %42, %44 : vector<8x256xf32>
    %cst_8 = arith.constant 0.000000e+00 : f32
    %46 = vector.broadcast %cst_8 : f32 to vector<8x256xf32>
    %47 = arith.maximumf %45, %46 : vector<8x256xf32>
    %48 = arith.truncf %47 : vector<8x256xf32> to vector<8x256xbf16>
    %c0_9 = arith.constant 0 : index
    %c0_10 = arith.constant 0 : index
    %49 = vector.load %arg4[%c0_9, %c0_10] : memref<256x128xbf16, #tpu.memory_space<vmem>>, vector<256x128xbf16>
    %cst_11 = arith.constant dense<0.000000e+00> : vector<8x128xf32>
    %50 = tpu.matmul %48, %49, %cst_11 {dimension_numbers = #tpu.dot_dimension_numbers<[1], [0], [0], [1], [0, 0, 1, 1], [], []>} : vector<8x256xbf16>, vector<256x128xbf16>, vector<8x128xf32> -> vector<8x128xf32>
    %c0_12 = arith.constant 0 : index
    %c0_13 = arith.constant 0 : index
    %51 = vector.load %arg5[%c0_12, %c0_13] : memref<1x128xf32, #tpu.memory_space<vmem>>, vector<1x128xf32>
    %52 = vector.broadcast %51 : vector<1x128xf32> to vector<8x128xf32>
    %53 = arith.addf %50, %52 : vector<8x128xf32>
    %c0_14 = arith.constant 0 : index
    %c0_15 = arith.constant 0 : index
    %54 = vector.load %arg6[%c0_14, %c0_15] : memref<8x128xf32, #tpu.memory_space<vmem>>, vector<8x128xf32>
    tpu.vector_store %arg6[%c0_14, %c0_15], %53 {strides = array<i32>} : memref<8x128xf32, #tpu.memory_space<vmem>>, vector<8x128xf32>,
    return
  }
}

</mosaic_0001>

<llo_original>
// kernel: textcnn_forward.1
$region0: #{textcnn_forward.1}
  #allocation0 [shape = 'u32[]', space=smem, size = 0x4, offset = 0x4, fixed_abs, tag = 'smem constant byte address 0x4 - core index']
  #allocation1 [shape = 'u32[144,128]{1,0:T(1,128)}', space=vmem, size = 0x12000, scoped, tag = 'internal scratch']
  %s0 = inlined_call_operand.vmem [shape: s32[128,1], index: 0, kind: input, shape index: {}]
  %s1 = inlined_call_operand.hbm [shape: bf16[384,128], index: 1, kind: input, shape index: {}]
  %s2 = inlined_call_operand.hbm [shape: bf16[384,256], index: 2, kind: input, shape index: {}]
  %s3 = inlined_call_operand.vmem [shape: f32[1,256], index: 3, kind: input, shape index: {}]
  %s4 = inlined_call_operand.vmem [shape: bf16[256,128], index: 4, kind: input, shape index: {}]
  %s5 = inlined_call_operand.vmem [shape: f32[1,128], index: 5, kind: input, shape index: {}]
  %s6 = inlined_call_operand.vmem [shape: f32[8,128], index: 6, kind: output, shape index: {}]
  %s7 = sld [smem:[#allocation0]]
  $region42: #{textcnn_forward.1} parent=0
    _
  %s9 = ssub.s32 1, %s7
  %s10 = scalar_select 0, %s9, %s7
  $region1: #{textcnn_forward.1} parent=0
    #allocation2 [shape = 'u8[98304]{0}', space=vmem, size = 0x18000, scoped, tag = 'input window, operand 1, single buffered']
    #allocation3 [shape = 's32[1]{0}', space=sflag, size = 0x4, scoped, tag = 'scoped memory for textcnn_forward.1']
    #allocation4 [shape = 'u8[196608]{0}', space=vmem, size = 0x30000, scoped, tag = 'input window, operand 2, single buffered']
    #allocation5 [shape = 's32[1]{0}', space=sflag, size = 0x4, scoped, tag = 'scoped memory for textcnn_forward.1']
    %11 = vsyncpa [#allocation3], 0
    %12 = vsyncpa [#allocation5], 0
    // Predicated region
    $region2: #{textcnn_forward.1} parent=1 // pred_check
      _
    $region3: #{textcnn_forward.1} parent=1 // pred_check_branch
      %14 = sbr.rel (0) target = $region5
    $region4: #{textcnn_forward.1} parent=1 // pred_region
      _
    $region5: #{textcnn_forward.1} parent=1 // pred_fallthru
      _
    // Predicated region
    $region6: #{textcnn_forward.1} parent=1 // pred_check
      _
    $region7: #{textcnn_forward.1} parent=1 // pred_check_branch
      %16 = sbr.rel (0) target = $region9
    $region8: #{textcnn_forward.1} parent=1 // pred_region
      %s18 = ssub.s32 3072, 3072
      %19 = vsyncadd [#allocation3], %s18
      %s20 = sshll.u32 [#allocation2], 4
      %s21 = int_to_ptr.vmem [resolvable:$true] %s20
      %26 = dma.hbm_to_vmem [thread:$0]  %s1, 3072, %s21, [#allocation3], 64, 64, 4
    $region9: #{textcnn_forward.1} parent=1 // pred_fallthru
      _
    // Predicated region
    $region10: #{textcnn_forward.1} parent=1 // pred_check
      _
    $region11: #{textcnn_forward.1} parent=1 // pred_check_branch
      %28 = sbr.rel (0) target = $region13
    $region12: #{textcnn_forward.1} parent=1 // pred_region
      %s30 = ssub.s32 6144, 6144
      %31 = vsyncadd [#allocation5], %s30
      %s32 = sshll.u32 [#allocation4], 4
      %s33 = int_to_ptr.vmem [resolvable:$true] %s32
      %38 = dma.hbm_to_vmem [thread:$0]  %s2, 6144, %s33, [#allocation5], 128, 128, 8
    $region13: #{textcnn_forward.1} parent=1 // pred_fallthru
      _
    // Predicated region
    $region14: #{textcnn_forward.1} parent=1 // pred_check
      _
    $region15: #{textcnn_forward.1} parent=1 // pred_check_branch
      %40 = sbr.rel (0) target = $region17
    $region16: #{textcnn_forward.1} parent=1 // pred_region
      _
    $region17: #{textcnn_forward.1} parent=1 // pred_fallthru
      _
    // Predicated region
    $region18: #{textcnn_forward.1} parent=1 // pred_check
      _
    $region19: #{textcnn_forward.1} parent=1 // pred_check_branch
      %42 = sbr.rel (0) target = $region21
    $region20: #{textcnn_forward.1} parent=1 // pred_region
      _
    $region21: #{textcnn_forward.1} parent=1 // pred_fallthru
      _
    // Predicated region
    $region22: #{textcnn_forward.1} parent=1 // pred_check
      _
    $region23: #{textcnn_forward.1} parent=1 // pred_check_branch
      %44 = sbr.rel (0) target = $region25
    $region24: #{textcnn_forward.1} parent=1 // pred_region
      _
    $region25: #{textcnn_forward.1} parent=1 // pred_fallthru
      _
    // Predicated region
    $region26: #{textcnn_forward.1} parent=1 // pred_check
      _
    $region27: #{textcnn_forward.1} parent=1 // pred_check_branch
      %46 = sbr.rel (0) target = $region29
    $region28: #{textcnn_forward.1} parent=1 // pred_region
      %47 = dma.done [#allocation3], 3072
    $region29: #{textcnn_forward.1} parent=1 // pred_fallthru
      _
    // Predicated region
    $region30: #{textcnn_forward.1} parent=1 // pred_check
      _
    $region31: #{textcnn_forward.1} parent=1 // pred_check_branch
      %49 = sbr.rel (0) target = $region33
    $region32: #{textcnn_forward.1} parent=1 // pred_region
      %50 = dma.done [#allocation5], 6144
    $region33: #{textcnn_forward.1} parent=1 // pred_fallthru
      _
    %v52 = vld [vmem:[%s0] sm:$0xff]
    %v53 = vld [vmem:[%s0 + $0x8] sm:$0xff]
    %v54 = vld [vmem:[%s0 + $0x10] sm:$0xff]
    %v55 = vld [vmem:[%s0 + $0x18] sm:$0xff]
    %v56 = vld [vmem:[%s0 + $0x20] sm:$0xff]
    %v57 = vld [vmem:[%s0 + $0x28] sm:$0xff]
    %v58 = vld [vmem:[%s0 + $0x30] sm:$0xff]
    %v59 = vld [vmem:[%s0 + $0x38] sm:$0xff]
    %v60 = vld [vmem:[%s0 + $0x40] sm:$0xff]
    %v61 = vld [vmem:[%s0 + $0x48] sm:$0xff]
    %v62 = vld [vmem:[%s0 + $0x50] sm:$0xff]
    %v63 = vld [vmem:[%s0 + $0x58] sm:$0xff]
    %v64 = vld [vmem:[%s0 + $0x60] sm:$0xff]
    %v65 = vld [vmem:[%s0 + $0x68] sm:$0xff]
    %v66 = vld [vmem:[%s0 + $0x70] sm:$0xff]
    %v67 = vld [vmem:[%s0 + $0x78] sm:$0xff]
    %v68 = vlaneseq
    %v69 = vand.u32 %v68, 127
    %v70 = vadd.s32 %v69, 128
    %v71 = vadd.s32 %v69, 256
    %72 = vset.pattern.permute.xlu0 0
    %73 = vperm.xlu0 %72, %v52
    %v74 = vpop.permute.xlu0 %73
    %75 = vset.pattern.permute.xlu0 0
    %76 = vperm.xlu0 %75, %v53
    %v77 = vpop.permute.xlu0 %76
    %78 = vset.pattern.permute.xlu0 0
    %79 = vperm.xlu0 %78, %v54
    %v80 = vpop.permute.xlu0 %79
    %81 = vset.pattern.permute.xlu0 0
    %82 = vperm.xlu0 %81, %v55
    %v83 = vpop.permute.xlu0 %82
    %84 = vset.pattern.permute.xlu0 0
    %85 = vperm.xlu0 %84, %v56
    %v86 = vpop.permute.xlu0 %85
    %87 = vset.pattern.permute.xlu0 0
    %88 = vperm.xlu0 %87, %v57
    %v89 = vpop.permute.xlu0 %88
    %90 = vset.pattern.permute.xlu0 0
    %91 = vperm.xlu0 %90, %v58
    %v92 = vpop.permute.xlu0 %91
    %93 = vset.pattern.permute.xlu0 0
    %94 = vperm.xlu0 %93, %v59
    %v95 = vpop.permute.xlu0 %94
    %96 = vset.pattern.permute.xlu0 0
    %97 = vperm.xlu0 %96, %v60
    %v98 = vpop.permute.xlu0 %97
    %99 = vset.pattern.permute.xlu0 0
    %100 = vperm.xlu0 %99, %v61
    %v101 = vpop.permute.xlu0 %100
    %102 = vset.pattern.permute.xlu0 0
    %103 = vperm.xlu0 %102, %v62
    %v104 = vpop.permute.xlu0 %103
    %105 = vset.pattern.permute.xlu0 0
    %106 = vperm.xlu0 %105, %v63
    %v107 = vpop.permute.xlu0 %106
    %108 = vset.pattern.permute.xlu0 0
    %109 = vperm.xlu0 %108, %v64
    %v110 = vpop.permute.xlu0 %109
    %111 = vset.pattern.permute.xlu0 0
    %112 = vperm.xlu0 %111, %v65
    %v113 = vpop.permute.xlu0 %112
    %114 = vset.pattern.permute.xlu0 0
    %115 = vperm.xlu0 %114, %v66
    %v116 = vpop.permute.xlu0 %115
    %117 = vset.pattern.permute.xlu0 0
    %118 = vperm.xlu0 %117, %v67
    %v119 = vpop.permute.xlu0 %118
    %vm120 = vcmp.eq.s32.totalorder %v69, %v74
    %vm121 = vcmp.eq.s32.totalorder %v70, %v74
    %vm122 = vcmp.eq.s32.totalorder %v71, %v74
    %vm123 = vcmp.eq.s32.totalorder %v69, %v77
    %vm124 = vcmp.eq.s32.totalorder %v70, %v77
    %vm125 = vcmp.eq.s32.totalorder %v71, %v77
    %vm126 = vcmp.eq.s32.totalorder %v69, %v80
    %vm127 = vcmp.eq.s32.totalorder %v70, %v80
    %vm128 = vcmp.eq.s32.totalorder %v71, %v80
    %vm129 = vcmp.eq.s32.totalorder %v69, %v83
    %vm130 = vcmp.eq.s32.totalorder %v70, %v83
    %vm131 = vcmp.eq.s32.totalorder %v71, %v83
    %vm132 = vcmp.eq.s32.totalorder %v69, %v86
    %vm133 = vcmp.eq.s32.totalorder %v70, %v86
    %vm134 = vcmp.eq.s32.totalorder %v71, %v86
    %vm135 = vcmp.eq.s32.totalorder %v69, %v89
    %vm136 = vcmp.eq.s32.totalorder %v70, %v89
    %vm137 = vcmp.eq.s32.totalorder %v71, %v89
    %vm138 = vcmp.eq.s32.totalorder %v69, %v92
    %vm139 = vcmp.eq.s32.totalorder %v70, %v92
    %vm140 = vcmp.eq.s32.totalorder %v71, %v92
    %vm141 = vcmp.eq.s32.totalorder %v69, %v95
    %vm142 = vcmp.eq.s32.totalorder %v70, %v95
    %vm143 = vcmp.eq.s32.totalorder %v71, %v95
    %vm144 = vcmp.eq.s32.totalorder %v69, %v98
    %vm145 = vcmp.eq.s32.totalorder %v70, %v98
    %vm146 = vcmp.eq.s32.totalorder %v71, %v98
    %vm147 = vcmp.eq.s32.totalorder %v69, %v101
    %vm148 = vcmp.eq.s32.totalorder %v70, %v101
    %vm149 = vcmp.eq.s32.totalorder %v71, %v101
    %vm150 = vcmp.eq.s32.totalorder %v69, %v104
    %vm151 = vcmp.eq.s32.totalorder %v70, %v104
    %vm152 = vcmp.eq.s32.totalorder %v71, %v104
    %vm153 = vcmp.eq.s32.totalorder %v69, %v107
    %vm154 = vcmp.eq.s32.totalorder %v70, %v107
    %vm155 = vcmp.eq.s32.totalorder %v71, %v107
    %vm156 = vcmp.eq.s32.totalorder %v69, %v110
    %vm157 = vcmp.eq.s32.totalorder %v70, %v110
    %vm158 = vcmp.eq.s32.totalorder %v71, %v110
    %vm159 = vcmp.eq.s32.totalorder %v69, %v113
    %vm160 = vcmp.eq.s32.totalorder %v70, %v113
    %vm161 = vcmp.eq.s32.totalorder %v71, %v113
    %vm162 = vcmp.eq.s32.totalorder %v69, %v116
    %vm163 = vcmp.eq.s32.totalorder %v70, %v116
    %vm164 = vcmp.eq.s32.totalorder %v71, %v116
    %vm165 = vcmp.eq.s32.totalorder %v69, %v119
    %vm166 = vcmp.eq.s32.totalorder %v70, %v119
    %vm167 = vcmp.eq.s32.totalorder %v71, %v119
    %v168 = vsel %vm120, 1, 0
    %v169 = vsel %vm121, 1, 0
    %v170 = vsel %vm122, 1, 0
    %v171 = vsel %vm123, 1, 0
    %v172 = vsel %vm124, 1, 0
    %v173 = vsel %vm125, 1, 0
    %v174 = vsel %vm126, 1, 0
    %v175 = vsel %vm127, 1, 0
    %v176 = vsel %vm128, 1, 0
    %v177 = vsel %vm129, 1, 0
    %v178 = vsel %vm130, 1, 0
    %v179 = vsel %vm131, 1, 0
    %v180 = vsel %vm132, 1, 0
    %v181 = vsel %vm133, 1, 0
    %v182 = vsel %vm134, 1, 0
    %v183 = vsel %vm135, 1, 0
    %v184 = vsel %vm136, 1, 0
    %v185 = vsel %vm137, 1, 0
    %v186 = vsel %vm138, 1, 0
    %v187 = vsel %vm139, 1, 0
    %v188 = vsel %vm140, 1, 0
    %v189 = vsel %vm141, 1, 0
    %v190 = vsel %vm142, 1, 0
    %v191 = vsel %vm143, 1, 0
    %v192 = vsel %vm144, 1, 0
    %v193 = vsel %vm145, 1, 0
    %v194 = vsel %vm146, 1, 0
    %v195 = vsel %vm147, 1, 0
    %v196 = vsel %vm148, 1, 0
    %v197 = vsel %vm149, 1, 0
    %v198 = vsel %vm150, 1, 0
    %v199 = vsel %vm151, 1, 0
    %v200 = vsel %vm152, 1, 0
    %v201 = vsel %vm153, 1, 0
    %v202 = vsel %vm154, 1, 0
    %v203 = vsel %vm155, 1, 0
    %v204 = vsel %vm156, 1, 0
    %v205 = vsel %vm157, 1, 0
    %v206 = vsel %vm158, 1, 0
    %v207 = vsel %vm159, 1, 0
    %v208 = vsel %vm160, 1, 0
    %v209 = vsel %vm161, 1, 0
    %v210 = vsel %vm162, 1, 0
    %v211 = vsel %vm163, 1, 0
    %v212 = vsel %vm164, 1, 0
    %v213 = vsel %vm165, 1, 0
    %v214 = vsel %vm166, 1, 0
    %v215 = vsel %vm167, 1, 0
    %v216 = vcvt.s32.f32 %v168
    %v217 = vcvt.s32.f32 %v169
    %v218 = vcvt.s32.f32 %v170
    %v219 = vcvt.s32.f32 %v171
    %v220 = vcvt.s32.f32 %v172
    %v221 = vcvt.s32.f32 %v173
    %v222 = vcvt.s32.f32 %v174
    %v223 = vcvt.s32.f32 %v175
    %v224 = vcvt.s32.f32 %v176
    %v225 = vcvt.s32.f32 %v177
    %v226 = vcvt.s32.f32 %v178
    %v227 = vcvt.s32.f32 %v179
    %v228 = vcvt.s32.f32 %v180
    %v229 = vcvt.s32.f32 %v181
    %v230 = vcvt.s32.f32 %v182
    %v231 = vcvt.s32.f32 %v183
    %v232 = vcvt.s32.f32 %v184
    %v233 = vcvt.s32.f32 %v185
    %v234 = vcvt.s32.f32 %v186
    %v235 = vcvt.s32.f32 %v187
    %v236 = vcvt.s32.f32 %v188
    %v237 = vcvt.s32.f32 %v189
    %v238 = vcvt.s32.f32 %v190
    %v239 = vcvt.s32.f32 %v191
    %v240 = vcvt.s32.f32 %v192
    %v241 = vcvt.s32.f32 %v193
    %v242 = vcvt.s32.f32 %v194
    %v243 = vcvt.s32.f32 %v195
    %v244 = vcvt.s32.f32 %v196
    %v245 = vcvt.s32.f32 %v197
    %v246 = vcvt.s32.f32 %v198
    %v247 = vcvt.s32.f32 %v199
    %v248 = vcvt.s32.f32 %v200
    %v249 = vcvt.s32.f32 %v201
    %v250 = vcvt.s32.f32 %v202
    %v251 = vcvt.s32.f32 %v203
    %v252 = vcvt.s32.f32 %v204
    %v253 = vcvt.s32.f32 %v205
    %v254 = vcvt.s32.f32 %v206
    %v255 = vcvt.s32.f32 %v207
    %v256 = vcvt.s32.f32 %v208
    %v257 = vcvt.s32.f32 %v209
    %v258 = vcvt.s32.f32 %v210
    %v259 = vcvt.s32.f32 %v211
    %v260 = vcvt.s32.f32 %v212
    %v261 = vcvt.s32.f32 %v213
    %v262 = vcvt.s32.f32 %v214
    %v263 = vcvt.s32.f32 %v215
    %v264 = vpack.c.bf16 %v219, %v216
    %v265 = vpack.c.bf16 %v220, %v217
    %v266 = vpack.c.bf16 %v221, %v218
    %v267 = vpack.c.bf16 %v225, %v222
    %v268 = vpack.c.bf16 %v226, %v223
    %v269 = vpack.c.bf16 %v227, %v224
    %v270 = vpack.c.bf16 %v231, %v228
    %v271 = vpack.c.bf16 %v232, %v229
    %v272 = vpack.c.bf16 %v233, %v230
    %v273 = vpack.c.bf16 %v237, %v234
    %v274 = vpack.c.bf16 %v238, %v235
    %v275 = vpack.c.bf16 %v239, %v236
    %v276 = vpack.c.bf16 %v243, %v240
    %v277 = vpack.c.bf16 %v244, %v241
    %v278 = vpack.c.bf16 %v245, %v242
    %v279 = vpack.c.bf16 %v249, %v246
    %v280 = vpack.c.bf16 %v250, %v247
    %v281 = vpack.c.bf16 %v251, %v248
    %v282 = vpack.c.bf16 %v255, %v252
    %v283 = vpack.c.bf16 %v256, %v253
    %v284 = vpack.c.bf16 %v257, %v254
    %v285 = vpack.c.bf16 %v261, %v258
    %v286 = vpack.c.bf16 %v262, %v259
    %v287 = vpack.c.bf16 %v263, %v260
    %v288 = vld [vmem:[#allocation2] sm:$0xf]
    %v289 = vld [vmem:[#allocation2 + $0x4] sm:$0xf]
    %v290 = vld [vmem:[#allocation2 + $0x8] sm:$0xf]
    %v291 = vld [vmem:[#allocation2 + $0xc] sm:$0xf]
    %v292 = vld [vmem:[#allocation2 + $0x10] sm:$0xf]
    %v293 = vld [vmem:[#allocation2 + $0x14] sm:$0xf]
    %v294 = vld [vmem:[#allocation2 + $0x18] sm:$0xf]
    %v295 = vld [vmem:[#allocation2 + $0x1c] sm:$0xf]
    %v296 = vld [vmem:[#allocation2 + $0x20] sm:$0xf]
    %v297 = vld [vmem:[#allocation2 + $0x24] sm:$0xf]
    %v298 = vld [vmem:[#allocation2 + $0x28] sm:$0xf]
    %v299 = vld [vmem:[#allocation2 + $0x2c] sm:$0xf]
    %v300 = vld [vmem:[#allocation2 + $0x30] sm:$0xf]
    %v301 = vld [vmem:[#allocation2 + $0x34] sm:$0xf]
    %v302 = vld [vmem:[#allocation2 + $0x38] sm:$0xf]
    %v303 = vld [vmem:[#allocation2 + $0x3c] sm:$0xf]
    %v304 = vld [vmem:[#allocation2 + $0x40] sm:$0xf]
    %v305 = vld [vmem:[#allocation2 + $0x44] sm:$0xf]
    %v306 = vld [vmem:[#allocation2 + $0x48] sm:$0xf]
    %v307 = vld [vmem:[#allocation2 + $0x4c] sm:$0xf]
    %v308 = vld [vmem:[#allocation2 + $0x50] sm:$0xf]
    %v309 = vld [vmem:[#allocation2 + $0x54] sm:$0xf]
    %v310 = vld [vmem:[#allocation2 + $0x58] sm:$0xf]
    %v311 = vld [vmem:[#allocation2 + $0x5c] sm:$0xf]
    %v312 = vld [vmem:[#allocation2 + $0x60] sm:$0xf]
    %v313 = vld [vmem:[#allocation2 + $0x64] sm:$0xf]
    %v314 = vld [vmem:[#allocation2 + $0x68] sm:$0xf]
    %v315 = vld [vmem:[#allocation2 + $0x6c] sm:$0xf]
    %v316 = vld [vmem:[#allocation2 + $0x70] sm:$0xf]
    %v317 = vld [vmem:[#allocation2 + $0x74] sm:$0xf]
    %v318 = vld [vmem:[#allocation2 + $0x78] sm:$0xf]
    %v319 = vld [vmem:[#allocation2 + $0x7c] sm:$0xf]
    %v320 = vld [vmem:[#allocation2 + $0x80] sm:$0xf]
    %v321 = vld [vmem:[#allocation2 + $0x84] sm:$0xf]
    %v322 = vld [vmem:[#allocation2 + $0x88] sm:$0xf]
    %v323 = vld [vmem:[#allocation2 + $0x8c] sm:$0xf]
    %v324 = vld [vmem:[#allocation2 + $0x90] sm:$0xf]
    %v325 = vld [vmem:[#allocation2 + $0x94] sm:$0xf]
    %v326 = vld [vmem:[#allocation2 + $0x98] sm:$0xf]
    %v327 = vld [vmem:[#allocation2 + $0x9c] sm:$0xf]
    %v328 = vld [vmem:[#allocation2 + $0xa0] sm:$0xf]
    %v329 = vld [vmem:[#allocation2 + $0xa4] sm:$0xf]
    %v330 = vld [vmem:[#allocation2 + $0xa8] sm:$0xf]
    %v331 = vld [vmem:[#allocation2 + $0xac] sm:$0xf]
    %v332 = vld [vmem:[#allocation2 + $0xb0] sm:$0xf]
    %v333 = vld [vmem:[#allocation2 + $0xb4] sm:$0xf]
    %v334 = vld [vmem:[#allocation2 + $0xb8] sm:$0xf]
    %v335 = vld [vmem:[#allocation2 + $0xbc] sm:$0xf]
    %v384 = vunpack.c.l.b16 %v288
    %v385 = vunpack.c.l.b16 %v289
    %v386 = vunpack.c.l.b16 %v290
    %v387 = vunpack.c.l.b16 %v291
    %v388 = vunpack.c.l.b16 %v292
    %v389 = vunpack.c.l.b16 %v293
    %v390 = vunpack.c.l.b16 %v294
    %v391 = vunpack.c.l.b16 %v295
    %v392 = vunpack.c.l.b16 %v296
    %v393 = vunpack.c.l.b16 %v297
    %v394 = vunpack.c.l.b16 %v298
    %v395 = vunpack.c.l.b16 %v299
    %v396 = vunpack.c.l.b16 %v300
    %v397 = vunpack.c.l.b16 %v301
    %v398 = vunpack.c.l.b16 %v302
    %v399 = vunpack.c.l.b16 %v303
    %v400 = vunpack.c.l.b16 %v304
    %v401 = vunpack.c.l.b16 %v305
    %v402 = vunpack.c.l.b16 %v306
    %v403 = vunpack.c.l.b16 %v307
    %v404 = vunpack.c.l.b16 %v308
    %v405 = vunpack.c.l.b16 %v309
    %v406 = vunpack.c.l.b16 %v310
    %v407 = vunpack.c.l.b16 %v311
    %v408 = vunpack.c.l.b16 %v312
    %v409 = vunpack.c.l.b16 %v313
    %v410 = vunpack.c.l.b16 %v314
    %v411 = vunpack.c.l.b16 %v315
    %v412 = vunpack.c.l.b16 %v316
    %v413 = vunpack.c.l.b16 %v317
    %v414 = vunpack.c.l.b16 %v318
    %v415 = vunpack.c.l.b16 %v319
    %v416 = vunpack.c.l.b16 %v320
    %v417 = vunpack.c.l.b16 %v321
    %v418 = vunpack.c.l.b16 %v322
    %v419 = vunpack.c.l.b16 %v323
    %v420 = vunpack.c.l.b16 %v324
    %v421 = vunpack.c.l.b16 %v325
    %v422 = vunpack.c.l.b16 %v326
    %v423 = vunpack.c.l.b16 %v327
    %v424 = vunpack.c.l.b16 %v328
    %v425 = vunpack.c.l.b16 %v329
    %v426 = vunpack.c.l.b16 %v330
    %v427 = vunpack.c.l.b16 %v331
    %v428 = vunpack.c.l.b16 %v332
    %v429 = vunpack.c.l.b16 %v333
    %v430 = vunpack.c.l.b16 %v334
    %v431 = vunpack.c.l.b16 %v335
    %v432 = vpack.c.b16 %v385, %v384
    %v433 = vpack.c.b16 %v387, %v386
    %v434 = vpack.c.b16 %v389, %v388
    %v435 = vpack.c.b16 %v391, %v390
    %v436 = vpack.c.b16 %v393, %v392
    %v437 = vpack.c.b16 %v395, %v394
    %v438 = vpack.c.b16 %v397, %v396
    %v439 = vpack.c.b16 %v399, %v398
    %v440 = vpack.c.b16 %v401, %v400
    %v441 = vpack.c.b16 %v403, %v402
    %v442 = vpack.c.b16 %v405, %v404
    %v443 = vpack.c.b16 %v407, %v406
    %v444 = vpack.c.b16 %v409, %v408
    %v445 = vpack.c.b16 %v411, %v410
    %v446 = vpack.c.b16 %v413, %v412
    %v447 = vpack.c.b16 %v415, %v414
    %v448 = vpack.c.b16 %v417, %v416
    %v449 = vpack.c.b16 %v419, %v418
    %v450 = vpack.c.b16 %v421, %v420
    %v451 = vpack.c.b16 %v423, %v422
    %v452 = vpack.c.b16 %v425, %v424
    %v453 = vpack.c.b16 %v427, %v426
    %v454 = vpack.c.b16 %v429, %v428
    %v455 = vpack.c.b16 %v431, %v430
    %480 = vmatprep.subr.bf16.mxu0 0
    %481 = vmatpush1.bf16.msra.mxu0 %v432
    %482 = vmatprep.subr.bf16.mxu0 0
    %483 = vmatpush1.bf16.msra.mxu0 %v433
    %484 = vmatprep.subr.bf16.mxu0 0
    %485 = vmatpush1.bf16.msra.mxu0 %v434
    %486 = vmatprep.subr.bf16.mxu0 0
    %487 = vmatpush1.bf16.msra.mxu0 %v435
    %488 = vmatprep.subr.bf16.mxu0 0
    %489 = vmatpush1.bf16.msra.mxu0 %v436
    %490 = vmatprep.subr.bf16.mxu0 0
    %491 = vmatpush1.bf16.msra.mxu0 %v437
    %492 = vmatprep.subr.bf16.mxu0 0
    %493 = vmatpush1.bf16.msra.mxu0 %v438
    %494 = vmatprep.subr.bf16.mxu0 0
    %495 = vmatpush1.bf16.msra.mxu0 %v439
    %496 = vmatprep.subr.bf16.mxu0 0
    %497 = vmatpush1.bf16.msra.mxu0 %v440
    %498 = vmatprep.subr.bf16.mxu0 0
    %499 = vmatpush1.bf16.msra.mxu0 %v441
    %500 = vmatprep.subr.bf16.mxu0 0
    %501 = vmatpush1.bf16.msra.mxu0 %v442
    %502 = vmatprep.subr.bf16.mxu0 0
    %503 = vmatpush1.bf16.msra.mxu0 %v443
    %504 = vmatprep.subr.bf16.mxu0 0
    %505 = vmatpush1.bf16.msra.mxu0 %v444
    %506 = vmatprep.subr.bf16.mxu0 0
    %507 = vmatpush1.bf16.msra.mxu0 %v445
    %508 = vmatprep.subr.bf16.mxu0 0
    %509 = vmatpush1.bf16.msra.mxu0 %v446
    %510 = vmatprep.subr.bf16.mxu0 0
    %511 = vmatpush1.bf16.msra.mxu0 %v447
    %512 = vmatprep.mubr.bf16.mxu0 %v265
    %513 = vmatmul.mubr.bf16.gmra.mrb[0].mxu0 %v264
    %v514 = vpop.f32.mrb[0].mxu0
    %v515 = vadd.f32 0.0, %v514
    %v516 = vpop.f32.mrb[0].mxu0
    %v517 = vpop.f32.mrb[0].mxu0
    %v518 = vadd.f32 0.0, %v517
    %v519 = vpop.f32.mrb[0].mxu0
    %520 = vmatprep.mubr.bf16.mxu0 %v268
    %521 = vmatmul.mubr.bf16.gmra.mrb[0].mxu0 %v267
    %v522 = vpop.f32.mrb[0].mxu0
    %v523 = vadd.f32 0.0, %v522
    %v524 = vpop.f32.mrb[0].mxu0
    %v525 = vpop.f32.mrb[0].mxu0
    %v526 = vadd.f32 0.0, %v525
    %v527 = vpop.f32.mrb[0].mxu0
    %528 = vmatprep.mubr.bf16.mxu0 %v271
    %529 = vmatmul.mubr.bf16.gmra.mrb[0].mxu0 %v270
    %v530 = vpop.f32.mrb[0].mxu0
    %v531 = vadd.f32 0.0, %v530
    %v532 = vpop.f32.mrb[0].mxu0
    %v533 = vpop.f32.mrb[0].mxu0
    %v534 = vadd.f32 0.0, %v533
    %v535 = vpop.f32.mrb[0].mxu0
    %536 = vmatprep.mubr.bf16.mxu0 %v274
    %537 = vmatmul.mubr.bf16.gmra.mrb[0].mxu0 %v273
    %v538 = vpop.f32.mrb[0].mxu0
    %v539 = vadd.f32 0.0, %v538
    %v540 = vpop.f32.mrb[0].mxu0
    %v541 = vpop.f32.mrb[0].mxu0
    %v542 = vadd.f32 0.0, %v541
    %v543 = vpop.f32.mrb[0].mxu0
    %544 = vmatprep.mubr.bf16.mxu0 %v277
    %545 = vmatmul.mubr.bf16.gmra.mrb[0].mxu0 %v276
    %v546 = vpop.f32.mrb[0].mxu0
    %v547 = vadd.f32 0.0, %v546
    %v548 = vpop.f32.mrb[0].mxu0
    %v549 = vpop.f32.mrb[0].mxu0
    %v550 = vadd.f32 0.0, %v549
    %v551 = vpop.f32.mrb[0].mxu0
    %552 = vmatprep.mubr.bf16.mxu0 %v280
    %553 = vmatmul.mubr.bf16.gmra.mrb[0].mxu0 %v279
    %v554 = vpop.f32.mrb[0].mxu0
    %v555 = vadd.f32 0.0, %v554
    %v556 = vpop.f32.mrb[0].mxu0
    %v557 = vpop.f32.mrb[0].mxu0
    %v558 = vadd.f32 0.0, %v557
    %v559 = vpop.f32.mrb[0].mxu0
    %560 = vmatprep.mubr.bf16.mxu0 %v283
    %561 = vmatmul.mubr.bf16.gmra.mrb[0].mxu0 %v282
    %v562 = vpop.f32.mrb[0].mxu0
    %v563 = vadd.f32 0.0, %v562
    %v564 = vpop.f32.mrb[0].mxu0
    %v565 = vpop.f32.mrb[0].mxu0
    %v566 = vadd.f32 0.0, %v565
    %v567 = vpop.f32.mrb[0].mxu0
    %568 = vmatprep.mubr.bf16.mxu0 %v286
    %569 = vmatmul.mubr.bf16.gmra.mrb[0].mxu0 %v285
    %v570 = vpop.f32.mrb[0].mxu0
    %v571 = vadd.f32 0.0, %v570
    %v572 = vpop.f32.mrb[0].mxu0
    %v573 = vpop.f32.mrb[0].mxu0
    %v574 = vadd.f32 0.0, %v573
    %v575 = vpop.f32.mrb[0].mxu0
    %576 = vdwg.mxu0
    %577 = vmatprep.subr.bf16.mxu0 0
    %578 = vmatpush1.bf16.msra.mxu0 %v448
    %579 = vmatprep.subr.bf16.mxu0 0
    %580 = vmatpush1.bf16.msra.mxu0 %v449
    %581 = vmatprep.subr.bf16.mxu0 0
    %582 = vmatpush1.bf16.msra.mxu0 %v450
    %583 = vmatprep.subr.bf16.mxu0 0
    %584 = vmatpush1.bf16.msra.mxu0 %v451
    %585 = vmatprep.subr.bf16.mxu0 0
    %586 = vmatpush1.bf16.msra.mxu0 %v452
    %587 = vmatprep.subr.bf16.mxu0 0
    %588 = vmatpush1.bf16.msra.mxu0 %v453
    %589 = vmatprep.subr.bf16.mxu0 0
    %590 = vmatpush1.bf16.msra.mxu0 %v454
    %591 = vmatprep.subr.bf16.mxu0 0
    %592 = vmatpush1.bf16.msra.mxu0 %v455
    %593 = vmatprep.subr.bf16.mxu0 0
    %594 = vmatpush1.bf16.msra.mxu0 0
    %595 = vmatprep.subr.bf16.mxu0 0
    %596 = vmatpush1.bf16.msra.mxu0 0
    %597 = vmatprep.subr.bf16.mxu0 0
    %598 = vmatpush1.bf16.msra.mxu0 0
    %599 = vmatprep.subr.bf16.mxu0 0
    %600 = vmatpush1.bf16.msra.mxu0 0
    %601 = vmatprep.subr.bf16.mxu0 0
    %602 = vmatpush1.bf16.msra.mxu0 0
    %603 = vmatprep.subr.bf16.mxu0 0
    %604 = vmatpush1.bf16.msra.mxu0 0
    %605 = vmatprep.subr.bf16.mxu0 0
    %606 = vmatpush1.bf16.msra.mxu0 0
    %607 = vmatprep.subr.bf16.mxu0 0
    %608 = vmatpush1.bf16.msra.mxu0 0
    %609 = vmatprep.mubr.bf16.mxu0 0
    %610 = vmatmul.mubr.bf16.gmra.mrb[0].mxu0 %v266
    %v611 = vpop.f32.mrb[0].mxu0
    %v612 = vadd.f32 %v515, %v611
    %v613 = vpop.f32.mrb[0].mxu0
    %v614 = vpop.f32.mrb[0].mxu0
    %v615 = vadd.f32 %v518, %v614
    %v616 = vpop.f32.mrb[0].mxu0
    %617 = vmatprep.mubr.bf16.mxu0 0
    %618 = vmatmul.mubr.bf16.gmra.mrb[0].mxu0 %v269
    %v619 = vpop.f32.mrb[0].mxu0
    %v620 = vadd.f32 %v523, %v619
    %v621 = vpop.f32.mrb[0].mxu0
    %v622 = vpop.f32.mrb[0].mxu0
    %v623 = vadd.f32 %v526, %v622
    %v624 = vpop.f32.mrb[0].mxu0
    %625 = vmatprep.mubr.bf16.mxu0 0
    %626 = vmatmul.mubr.bf16.gmra.mrb[0].mxu0 %v272
    %v627 = vpop.f32.mrb[0].mxu0
    %v628 = vadd.f32 %v531, %v627
    %v629 = vpop.f32.mrb[0].mxu0
    %v630 = vpop.f32.mrb[0].mxu0
    %v631 = vadd.f32 %v534, %v630
    %v632 = vpop.f32.mrb[0].mxu0
    %633 = vmatprep.mubr.bf16.mxu0 0
    %634 = vmatmul.mubr.bf16.gmra.mrb[0].mxu0 %v275
    %v635 = vpop.f32.mrb[0].mxu0
    %v636 = vadd.f32 %v539, %v635
    %v637 = vpop.f32.mrb[0].mxu0
    %v638 = vpop.f32.mrb[0].mxu0
    %v639 = vadd.f32 %v542, %v638
    %v640 = vpop.f32.mrb[0].mxu0
    %641 = vmatprep.mubr.bf16.mxu0 0
    %642 = vmatmul.mubr.bf16.gmra.mrb[0].mxu0 %v278
    %v643 = vpop.f32.mrb[0].mxu0
    %v644 = vadd.f32 %v547, %v643
    %v645 = vpop.f32.mrb[0].mxu0
    %v646 = vpop.f32.mrb[0].mxu0
    %v647 = vadd.f32 %v550, %v646
    %v648 = vpop.f32.mrb[0].mxu0
    %649 = vmatprep.mubr.bf16.mxu0 0
    %650 = vmatmul.mubr.bf16.gmra.mrb[0].mxu0 %v281
    %v651 = vpop.f32.mrb[0].mxu0
    %v652 = vadd.f32 %v555, %v651
    %v653 = vpop.f32.mrb[0].mxu0
    %v654 = vpop.f32.mrb[0].mxu0
    %v655 = vadd.f32 %v558, %v654
    %v656 = vpop.f32.mrb[0].mxu0
    %657 = vmatprep.mubr.bf16.mxu0 0
    %658 = vmatmul.mubr.bf16.gmra.mrb[0].mxu0 %v284
    %v659 = vpop.f32.mrb[0].mxu0
    %v660 = vadd.f32 %v563, %v659
    %v661 = vpop.f32.mrb[0].mxu0
    %v662 = vpop.f32.mrb[0].mxu0
    %v663 = vadd.f32 %v566, %v662
    %v664 = vpop.f32.mrb[0].mxu0
    %665 = vmatprep.mubr.bf16.mxu0 0
    %666 = vmatmul.mubr.bf16.gmra.mrb[0].mxu0 %v287
    %v667 = vpop.f32.mrb[0].mxu0
    %v668 = vadd.f32 %v571, %v667
    %v669 = vpop.f32.mrb[0].mxu0
    %v670 = vpop.f32.mrb[0].mxu0
    %v671 = vadd.f32 %v574, %v670
    %v672 = vpop.f32.mrb[0].mxu0
    %673 = vdwg.mxu0
    %v674 = vpack.c.bf16 %v615, %v612
    %v675 = vpack.c.bf16 %v620, %v615
    %v676 = vpack.c.bf16 %v623, %v620
    %v677 = vpack.c.bf16 %v628, %v623
    %v678 = vpack.c.bf16 %v631, %v628
    %v679 = vpack.c.bf16 %v636, %v631
    %v680 = vpack.c.bf16 %v639, %v636
    %v681 = vpack.c.bf16 %v644, %v639
    %v682 = vpack.c.bf16 %v647, %v644
    %v683 = vpack.c.bf16 %v652, %v647
    %v684 = vpack.c.bf16 %v655, %v652
    %v685 = vpack.c.bf16 %v660, %v655
    %v686 = vpack.c.bf16 %v663, %v660
    %v687 = vpack.c.bf16 %v668, %v663
    %v688 = vpack.c.bf16 %v671, %v668
    %v689 = vld [vmem:[#allocation4] sm:$0xff]
    %v690 = vld [vmem:[#allocation4 + $0x8] sm:$0xff]
    %v691 = vld [vmem:[#allocation4 + $0x10] sm:$0xff]
    %v692 = vld [vmem:[#allocation4 + $0x18] sm:$0xff]
    %v693 = vld [vmem:[#allocation4 + $0x20] sm:$0xff]
    %v694 = vld [vmem:[#allocation4 + $0x28] sm:$0xff]
    %v695 = vld [vmem:[#allocation4 + $0x30] sm:$0xff]
    %v696 = vld [vmem:[#allocation4 + $0x38] sm:$0xff]
    %v697 = vld [vmem:[#allocation4 + $0x40] sm:$0xff]
    %v698 = vld [vmem:[#allocation4 + $0x48] sm:$0xff]
    %v699 = vld [vmem:[#allocation4 + $0x50] sm:$0xff]
    %v700 = vld [vmem:[#allocation4 + $0x58] sm:$0xff]
    %v701 = vld [vmem:[#allocation4 + $0x60] sm:$0xff]
    %v702 = vld [vmem:[#allocation4 + $0x68] sm:$0xff]
    %v703 = vld [vmem:[#allocation4 + $0x70] sm:$0xff]
    %v704 = vld [vmem:[#allocation4 + $0x78] sm:$0xff]
    %v705 = vld [vmem:[#allocation4 + $0x80] sm:$0xff]
    %v706 = vld [vmem:[#allocation4 + $0x88] sm:$0xff]
    %v707 = vld [vmem:[#allocation4 + $0x90] sm:$0xff]
    %v708 = vld [vmem:[#allocation4 + $0x98] sm:$0xff]
    %v709 = vld [vmem:[#allocation4 + $0xa0] sm:$0xff]
    %v710 = vld [vmem:[#allocation4 + $0xa8] sm:$0xff]
    %v711 = vld [vmem:[#allocation4 + $0xb0] sm:$0xff]
    %v712 = vld [vmem:[#allocation4 + $0xb8] sm:$0xff]
    %v713 = vld [vmem:[#allocation4 + $0xc0] sm:$0xff]
    %v714 = vld [vmem:[#allocation4 + $0xc8] sm:$0xff]
    %v715 = vld [vmem:[#allocation4 + $0xd0] sm:$0xff]
    %v716 = vld [vmem:[#allocation4 + $0xd8] sm:$0xff]
    %v717 = vld [vmem:[#allocation4 + $0xe0] sm:$0xff]
    %v718 = vld [vmem:[#allocation4 + $0xe8] sm:$0xff]
    %v719 = vld [vmem:[#allocation4 + $0xf0] sm:$0xff]
    %v720 = vld [vmem:[#allocation4 + $0xf8] sm:$0xff]
    %v721 = vld [vmem:[#allocation4 + $0x100] sm:$0xff]
    %v722 = vld [vmem:[#allocation4 + $0x108] sm:$0xff]
    %v723 = vld [vmem:[#allocation4 + $0x110] sm:$0xff]
    %v724 = vld [vmem:[#allocation4 + $0x118] sm:$0xff]
    %v725 = vld [vmem:[#allocation4 + $0x120] sm:$0xff]
    %v726 = vld [vmem:[#allocation4 + $0x128] sm:$0xff]
    %v727 = vld [vmem:[#allocation4 + $0x130] sm:$0xff]
    %v728 = vld [vmem:[#allocation4 + $0x138] sm:$0xff]
    %v729 = vld [vmem:[#allocation4 + $0x140] sm:$0xff]
    %v730 = vld [vmem:[#allocation4 + $0x148] sm:$0xff]
    %v731 = vld [vmem:[#allocation4 + $0x150] sm:$0xff]
    %v732 = vld [vmem:[#allocation4 + $0x158] sm:$0xff]
    %v733 = vld [vmem:[#allocation4 + $0x160] sm:$0xff]
    %v734 = vld [vmem:[#allocation4 + $0x168] sm:$0xff]
    %v735 = vld [vmem:[#allocation4 + $0x170] sm:$0xff]
    %v736 = vld [vmem:[#allocation4 + $0x178] sm:$0xff]
    %v785 = vunpack.c.l.b16 %v689
    %v786 = vunpack.c.h.b16 %v689
    %v787 = vunpack.c.l.b16 %v690
    %v788 = vunpack.c.h.b16 %v690
    %v789 = vunpack.c.l.b16 %v691
    %v790 = vunpack.c.h.b16 %v691
    %v791 = vunpack.c.l.b16 %v692
    %v792 = vunpack.c.h.b16 %v692
    %v793 = vunpack.c.l.b16 %v693
    %v794 = vunpack.c.h.b16 %v693
    %v795 = vunpack.c.l.b16 %v694
    %v796 = vunpack.c.h.b16 %v694
    %v797 = vunpack.c.l.b16 %v695
    %v798 = vunpack.c.h.b16 %v695
    %v799 = vunpack.c.l.b16 %v696
    %v800 = vunpack.c.h.b16 %v696
    %v801 = vunpack.c.l.b16 %v697
    %v802 = vunpack.c.h.b16 %v697
    %v803 = vunpack.c.l.b16 %v698
    %v804 = vunpack.c.h.b16 %v698
    %v805 = vunpack.c.l.b16 %v699
    %v806 = vunpack.c.h.b16 %v699
    %v807 = vunpack.c.l.b16 %v700
    %v808 = vunpack.c.h.b16 %v700
    %v809 = vunpack.c.l.b16 %v701
    %v810 = vunpack.c.h.b16 %v701
    %v811 = vunpack.c.l.b16 %v702
    %v812 = vunpack.c.h.b16 %v702
    %v813 = vunpack.c.l.b16 %v703
    %v814 = vunpack.c.h.b16 %v703
    %v815 = vunpack.c.l.b16 %v704
    %v816 = vunpack.c.h.b16 %v704
    %v817 = vunpack.c.l.b16 %v705
    %v818 = vunpack.c.h.b16 %v705
    %v819 = vunpack.c.l.b16 %v706
    %v820 = vunpack.c.h.b16 %v706
    %v821 = vunpack.c.l.b16 %v707
    %v822 = vunpack.c.h.b16 %v707
    %v823 = vunpack.c.l.b16 %v708
    %v824 = vunpack.c.h.b16 %v708
    %v825 = vunpack.c.l.b16 %v709
    %v826 = vunpack.c.h.b16 %v709
    %v827 = vunpack.c.l.b16 %v710
    %v828 = vunpack.c.h.b16 %v710
    %v829 = vunpack.c.l.b16 %v711
    %v830 = vunpack.c.h.b16 %v711
    %v831 = vunpack.c.l.b16 %v712
    %v832 = vunpack.c.h.b16 %v712
    %v833 = vunpack.c.l.b16 %v713
    %v834 = vunpack.c.h.b16 %v713
    %v835 = vunpack.c.l.b16 %v714
    %v836 = vunpack.c.h.b16 %v714
    %v837 = vunpack.c.l.b16 %v715
    %v838 = vunpack.c.h.b16 %v715
    %v839 = vunpack.c.l.b16 %v716
    %v840 = vunpack.c.h.b16 %v716
    %v841 = vunpack.c.l.b16 %v717
    %v842 = vunpack.c.h.b16 %v717
    %v843 = vunpack.c.l.b16 %v718
    %v844 = vunpack.c.h.b16 %v718
    %v845 = vunpack.c.l.b16 %v719
    %v846 = vunpack.c.h.b16 %v719
    %v847 = vunpack.c.l.b16 %v720
    %v848 = vunpack.c.h.b16 %v720
    %v849 = vunpack.c.l.b16 %v721
    %v850 = vunpack.c.h.b16 %v721
    %v851 = vunpack.c.l.b16 %v722
    %v852 = vunpack.c.h.b16 %v722
    %v853 = vunpack.c.l.b16 %v723
    %v854 = vunpack.c.h.b16 %v723
    %v855 = vunpack.c.l.b16 %v724
    %v856 = vunpack.c.h.b16 %v724
    %v857 = vunpack.c.l.b16 %v725
    %v858 = vunpack.c.h.b16 %v725
    %v859 = vunpack.c.l.b16 %v726
    %v860 = vunpack.c.h.b16 %v726
    %v861 = vunpack.c.l.b16 %v727
    %v862 = vunpack.c.h.b16 %v727
    %v863 = vunpack.c.l.b16 %v728
    %v864 = vunpack.c.h.b16 %v728
    %v865 = vunpack.c.l.b16 %v729
    %v866 = vunpack.c.h.b16 %v729
    %v867 = vunpack.c.l.b16 %v730
    %v868 = vunpack.c.h.b16 %v730
    %v869 = vunpack.c.l.b16 %v731
    %v870 = vunpack.c.h.b16 %v731
    %v871 = vunpack.c.l.b16 %v732
    %v872 = vunpack.c.h.b16 %v732
    %v873 = vunpack.c.l.b16 %v733
    %v874 = vunpack.c.h.b16 %v733
    %v875 = vunpack.c.l.b16 %v734
    %v876 = vunpack.c.h.b16 %v734
    %v877 = vunpack.c.l.b16 %v735
    %v878 = vunpack.c.h.b16 %v735
    %v879 = vunpack.c.l.b16 %v736
    %v880 = vunpack.c.h.b16 %v736
    %v881 = vpack.c.b16 %v787, %v785
    %v882 = vpack.c.b16 %v788, %v786
    %v883 = vpack.c.b16 %v791, %v789
    %v884 = vpack.c.b16 %v792, %v790
    %v885 = vpack.c.b16 %v795, %v793
    %v886 = vpack.c.b16 %v796, %v794
    %v887 = vpack.c.b16 %v799, %v797
    %v888 = vpack.c.b16 %v800, %v798
    %v889 = vpack.c.b16 %v803, %v801
    %v890 = vpack.c.b16 %v804, %v802
    %v891 = vpack.c.b16 %v807, %v805
    %v892 = vpack.c.b16 %v808, %v806
    %v893 = vpack.c.b16 %v811, %v809
    %v894 = vpack.c.b16 %v812, %v810
    %v895 = vpack.c.b16 %v815, %v813
    %v896 = vpack.c.b16 %v816, %v814
    %v897 = vpack.c.b16 %v819, %v817
    %v898 = vpack.c.b16 %v820, %v818
    %v899 = vpack.c.b16 %v823, %v821
    %v900 = vpack.c.b16 %v824, %v822
    %v901 = vpack.c.b16 %v827, %v825
    %v902 = vpack.c.b16 %v828, %v826
    %v903 = vpack.c.b16 %v831, %v829
    %v904 = vpack.c.b16 %v832, %v830
    %v905 = vpack.c.b16 %v835, %v833
    %v906 = vpack.c.b16 %v836, %v834
    %v907 = vpack.c.b16 %v839, %v837
    %v908 = vpack.c.b16 %v840, %v838
    %v909 = vpack.c.b16 %v843, %v841
    %v910 = vpack.c.b16 %v844, %v842
    %v911 = vpack.c.b16 %v847, %v845
    %v912 = vpack.c.b16 %v848, %v846
    %v913 = vpack.c.b16 %v851, %v849
    %v914 = vpack.c.b16 %v852, %v850
    %v915 = vpack.c.b16 %v855, %v853
    %v916 = vpack.c.b16 %v856, %v854
    %v917 = vpack.c.b16 %v859, %v857
    %v918 = vpack.c.b16 %v860, %v858
    %v919 = vpack.c.b16 %v863, %v861
    %v920 = vpack.c.b16 %v864, %v862
    %v921 = vpack.c.b16 %v867, %v865
    %v922 = vpack.c.b16 %v868, %v866
    %v923 = vpack.c.b16 %v871, %v869
    %v924 = vpack.c.b16 %v872, %v870
    %v925 = vpack.c.b16 %v875, %v873
    %v926 = vpack.c.b16 %v876, %v874
    %v927 = vpack.c.b16 %v879, %v877
    %v928 = vpack.c.b16 %v880, %v878
    %977 = vmatprep.subr.bf16.mxu0 %v882
    %978 = vmatpush1.bf16.msra.mxu0 %v881
    %979 = vmatprep.subr.bf16.mxu0 %v884
    %980 = vmatpush1.bf16.msra.mxu0 %v883
    %981 = vmatprep.subr.bf16.mxu0 %v886
    %982 = vmatpush1.bf16.msra.mxu0 %v885
    %983 = vmatprep.subr.bf16.mxu0 %v888
    %984 = vmatpush1.bf16.msra.mxu0 %v887
    %985 = vmatprep.subr.bf16.mxu0 %v890
    %986 = vmatpush1.bf16.msra.mxu0 %v889
    %987 = vmatprep.subr.bf16.mxu0 %v892
    %988 = vmatpush1.bf16.msra.mxu0 %v891
    %989 = vmatprep.subr.bf16.mxu0 %v894
    %990 = vmatpush1.bf16.msra.mxu0 %v893
    %991 = vmatprep.subr.bf16.mxu0 %v896
    %992 = vmatpush1.bf16.msra.mxu0 %v895
    %993 = vmatprep.subr.bf16.mxu0 %v898
    %994 = vmatpush1.bf16.msra.mxu0 %v897
    %995 = vmatprep.subr.bf16.mxu0 %v900
    %996 = vmatpush1.bf16.msra.mxu0 %v899
    %997 = vmatprep.subr.bf16.mxu0 %v902
    %998 = vmatpush1.bf16.msra.mxu0 %v901
    %999 = vmatprep.subr.bf16.mxu0 %v904
    %1000 = vmatpush1.bf16.msra.mxu0 %v903
    %1001 = vmatprep.subr.bf16.mxu0 %v906
    %1002 = vmatpush1.bf16.msra.mxu0 %v905
    %1003 = vmatprep.subr.bf16.mxu0 %v908
    %1004 = vmatpush1.bf16.msra.mxu0 %v907
    %1005 = vmatprep.subr.bf16.mxu0 %v910
    %1006 = vmatpush1.bf16.msra.mxu0 %v909
    %1007 = vmatprep.subr.bf16.mxu0 %v912
    %1008 = vmatpush1.bf16.msra.mxu0 %v911
    %1009 = vmatprep.mubr.bf16.mxu0 %v675
    %1010 = vmatmul.mubr.bf16.gmra.mrb[0].mxu0 %v674
    %v1011 = vpop.f32.mrb[0].mxu0
    %v1012 = vadd.f32 0.0, %v1011
    %v1013 = vpop.f32.mrb[0].mxu0
    %v1014 = vadd.f32 0.0, %v1013
    %v1015 = vpop.f32.mrb[0].mxu0
    %v1016 = vadd.f32 0.0, %v1015
    %v1017 = vpop.f32.mrb[0].mxu0
    %v1018 = vadd.f32 0.0, %v1017
    %1019 = vmatprep.mubr.bf16.mxu0 %v677
    %1020 = vmatmul.mubr.bf16.gmra.mrb[0].mxu0 %v676
    %v1021 = vpop.f32.mrb[0].mxu0
    %v1022 = vadd.f32 0.0, %v1021
    %v1023 = vpop.f32.mrb[0].mxu0
    %v1024 = vadd.f32 0.0, %v1023
    %v1025 = vpop.f32.mrb[0].mxu0
    %v1026 = vadd.f32 0.0, %v1025
    %v1027 = vpop.f32.mrb[0].mxu0
    %v1028 = vadd.f32 0.0, %v1027
    %1029 = vmatprep.mubr.bf16.mxu0 %v679
    %1030 = vmatmul.mubr.bf16.gmra.mrb[0].mxu0 %v678
    %v1031 = vpop.f32.mrb[0].mxu0
    %v1032 = vadd.f32 0.0, %v1031
    %v1033 = vpop.f32.mrb[0].mxu0
    %v1034 = vadd.f32 0.0, %v1033
    %v1035 = vpop.f32.mrb[0].mxu0
    %v1036 = vadd.f32 0.0, %v1035
    %v1037 = vpop.f32.mrb[0].mxu0
    %v1038 = vadd.f32 0.0, %v1037
    %1039 = vmatprep.mubr.bf16.mxu0 %v681
    %1040 = vmatmul.mubr.bf16.gmra.mrb[0].mxu0 %v680
    %v1041 = vpop.f32.mrb[0].mxu0
    %v1042 = vadd.f32 0.0, %v1041
    %v1043 = vpop.f32.mrb[0].mxu0
    %v1044 = vadd.f32 0.0, %v1043
    %v1045 = vpop.f32.mrb[0].mxu0
    %v1046 = vadd.f32 0.0, %v1045
    %v1047 = vpop.f32.mrb[0].mxu0
    %v1048 = vadd.f32 0.0, %v1047
    %1049 = vmatprep.mubr.bf16.mxu0 %v683
    %1050 = vmatmul.mubr.bf16.gmra.mrb[0].mxu0 %v682
    %v1051 = vpop.f32.mrb[0].mxu0
    %v1052 = vadd.f32 0.0, %v1051
    %v1053 = vpop.f32.mrb[0].mxu0
    %v1054 = vadd.f32 0.0, %v1053
    %v1055 = vpop.f32.mrb[0].mxu0
    %v1056 = vadd.f32 0.0, %v1055
    %v1057 = vpop.f32.mrb[0].mxu0
    %v1058 = vadd.f32 0.0, %v1057
    %1059 = vmatprep.mubr.bf16.mxu0 %v685
    %1060 = vmatmul.mubr.bf16.gmra.mrb[0].mxu0 %v684
    %v1061 = vpop.f32.mrb[0].mxu0
    %v1062 = vadd.f32 0.0, %v1061
    %v1063 = vpop.f32.mrb[0].mxu0
    %v1064 = vadd.f32 0.0, %v1063
    %v1065 = vpop.f32.mrb[0].mxu0
    %v1066 = vadd.f32 0.0, %v1065
    %v1067 = vpop.f32.mrb[0].mxu0
    %v1068 = vadd.f32 0.0, %v1067
    %1069 = vmatprep.mubr.bf16.mxu0 %v687
    %1070 = vmatmul.mubr.bf16.gmra.mrb[0].mxu0 %v686
    %v1071 = vpop.f32.mrb[0].mxu0
    %v1072 = vadd.f32 0.0, %v1071
    %v1073 = vpop.f32.mrb[0].mxu0
    %v1074 = vadd.f32 0.0, %v1073
    %v1075 = vpop.f32.mrb[0].mxu0
    %v1076 = vadd.f32 0.0, %v1075
    %v1077 = vpop.f32.mrb[0].mxu0
    %v1078 = vadd.f32 0.0, %v1077
    %1079 = vdwg.mxu0
    %1080 = vmatprep.subr.bf16.mxu0 %v914
    %1081 = vmatpush1.bf16.msra.mxu0 %v913
    %1082 = vmatprep.subr.bf16.mxu0 %v916
    %1083 = vmatpush1.bf16.msra.mxu0 %v915
    %1084 = vmatprep.subr.bf16.mxu0 %v918
    %1085 = vmatpush1.bf16.msra.mxu0 %v917
    %1086 = vmatprep.subr.bf16.mxu0 %v920
    %1087 = vmatpush1.bf16.msra.mxu0 %v919
    %1088 = vmatprep.subr.bf16.mxu0 %v922
    %1089 = vmatpush1.bf16.msra.mxu0 %v921
    %1090 = vmatprep.subr.bf16.mxu0 %v924
    %1091 = vmatpush1.bf16.msra.mxu0 %v923
    %1092 = vmatprep.subr.bf16.mxu0 %v926
    %1093 = vmatpush1.bf16.msra.mxu0 %v925
    %1094 = vmatprep.subr.bf16.mxu0 %v928
    %1095 = vmatpush1.bf16.msra.mxu0 %v927
    %1096 = vmatprep.subr.bf16.mxu0 0
    %1097 = vmatpush1.bf16.msra.mxu0 0
    %1098 = vmatprep.subr.bf16.mxu0 0
    %1099 = vmatpush1.bf16.msra.mxu0 0
    %1100 = vmatprep.subr.bf16.mxu0 0
    %1101 = vmatpush1.bf16.msra.mxu0 0
    %1102 = vmatprep.subr.bf16.mxu0 0
    %1103 = vmatpush1.bf16.msra.mxu0 0
    %1104 = vmatprep.subr.bf16.mxu0 0
    %1105 = vmatpush1.bf16.msra.mxu0 0
    %1106 = vmatprep.subr.bf16.mxu0 0
    %1107 = vmatpush1.bf16.msra.mxu0 0
    %1108 = vmatprep.subr.bf16.mxu0 0
    %1109 = vmatpush1.bf16.msra.mxu0 0
    %1110 = vmatprep.subr.bf16.mxu0 0
    %1111 = vmatpush1.bf16.msra.mxu0 0
    %1112 = vmatprep.mubr.bf16.mxu0 0
    %1113 = vmatmul.mubr.bf16.gmra.mrb[0].mxu0 %v676
    %v1114 = vpop.f32.mrb[0].mxu0
    %v1115 = vadd.f32 %v1012, %v1114
    %v1116 = vpop.f32.mrb[0].mxu0
    %v1117 = vadd.f32 %v1014, %v1116
    %v1118 = vpop.f32.mrb[0].mxu0
    %v1119 = vadd.f32 %v1016, %v1118
    %v1120 = vpop.f32.mrb[0].mxu0
    %v1121 = vadd.f32 %v1018, %v1120
    %1122 = vmatprep.mubr.bf16.mxu0 0
    %1123 = vmatmul.mubr.bf16.gmra.mrb[0].mxu0 %v678
    %v1124 = vpop.f32.mrb[0].mxu0
    %v1125 = vadd.f32 %v1022, %v1124
    %v1126 = vpop.f32.mrb[0].mxu0
    %v1127 = vadd.f32 %v1024, %v1126
    %v1128 = vpop.f32.mrb[0].mxu0
    %v1129 = vadd.f32 %v1026, %v1128
    %v1130 = vpop.f32.mrb[0].mxu0
    %v1131 = vadd.f32 %v1028, %v1130
    %1132 = vmatprep.mubr.bf16.mxu0 0
    %1133 = vmatmul.mubr.bf16.gmra.mrb[0].mxu0 %v680
    %v1134 = vpop.f32.mrb[0].mxu0
    %v1135 = vadd.f32 %v1032, %v1134
    %v1136 = vpop.f32.mrb[0].mxu0
    %v1137 = vadd.f32 %v1034, %v1136
    %v1138 = vpop.f32.mrb[0].mxu0
    %v1139 = vadd.f32 %v1036, %v1138
    %v1140 = vpop.f32.mrb[0].mxu0
    %v1141 = vadd.f32 %v1038, %v1140
    %1142 = vmatprep.mubr.bf16.mxu0 0
    %1143 = vmatmul.mubr.bf16.gmra.mrb[0].mxu0 %v682
    %v1144 = vpop.f32.mrb[0].mxu0
    %v1145 = vadd.f32 %v1042, %v1144
    %v1146 = vpop.f32.mrb[0].mxu0
    %v1147 = vadd.f32 %v1044, %v1146
    %v1148 = vpop.f32.mrb[0].mxu0
    %v1149 = vadd.f32 %v1046, %v1148
    %v1150 = vpop.f32.mrb[0].mxu0
    %v1151 = vadd.f32 %v1048, %v1150
    %1152 = vmatprep.mubr.bf16.mxu0 0
    %1153 = vmatmul.mubr.bf16.gmra.mrb[0].mxu0 %v684
    %v1154 = vpop.f32.mrb[0].mxu0
    %v1155 = vadd.f32 %v1052, %v1154
    %v1156 = vpop.f32.mrb[0].mxu0
    %v1157 = vadd.f32 %v1054, %v1156
    %v1158 = vpop.f32.mrb[0].mxu0
    %v1159 = vadd.f32 %v1056, %v1158
    %v1160 = vpop.f32.mrb[0].mxu0
    %v1161 = vadd.f32 %v1058, %v1160
    %1162 = vmatprep.mubr.bf16.mxu0 0
    %1163 = vmatmul.mubr.bf16.gmra.mrb[0].mxu0 %v686
    %v1164 = vpop.f32.mrb[0].mxu0
    %v1165 = vadd.f32 %v1062, %v1164
    %v1166 = vpop.f32.mrb[0].mxu0
    %v1167 = vadd.f32 %v1064, %v1166
    %v1168 = vpop.f32.mrb[0].mxu0
    %v1169 = vadd.f32 %v1066, %v1168
    %v1170 = vpop.f32.mrb[0].mxu0
    %v1171 = vadd.f32 %v1068, %v1170
    %1172 = vmatprep.mubr.bf16.mxu0 0
    %1173 = vmatmul.mubr.bf16.gmra.mrb[0].mxu0 %v688
    %v1174 = vpop.f32.mrb[0].mxu0
    %v1175 = vadd.f32 %v1072, %v1174
    %v1176 = vpop.f32.mrb[0].mxu0
    %v1177 = vadd.f32 %v1074, %v1176
    %v1178 = vpop.f32.mrb[0].mxu0
    %v1179 = vadd.f32 %v1076, %v1178
    %v1180 = vpop.f32.mrb[0].mxu0
    %v1181 = vadd.f32 %v1078, %v1180
    %1182 = vdwg.mxu0
    %v1183 = vmax.f32 %v1115, %v1119
    %v1184 = vmax.f32 %v1117, %v1121
    %v1185 = vmax.f32 %v1125, %v1129
    %v1186 = vmax.f32 %v1127, %v1131
    %v1187 = vmax.f32 %v1135, %v1139
    %v1188 = vmax.f32 %v1137, %v1141
    %v1189 = vmax.f32 %v1145, %v1149
    %v1190 = vmax.f32 %v1147, %v1151
    %v1191 = vmax.f32 %v1155, %v1159
    %v1192 = vmax.f32 %v1157, %v1161
    %v1193 = vmax.f32 %v1165, %v1169
    %v1194 = vmax.f32 %v1167, %v1171
    %v1195 = vmax.f32 %v1175, %v1179
    %v1196 = vmax.f32 %v1177, %v1181
    %v1197 = vmax.f32 %v1183, %v1185
    %v1198 = vmax.f32 %v1184, %v1186
    %v1199 = vmax.f32 %v1187, %v1189
    %v1200 = vmax.f32 %v1188, %v1190
    %v1201 = vmax.f32 %v1191, %v1193
    %v1202 = vmax.f32 %v1192, %v1194
    %v1203 = vmax.f32 %v1197, %v1199
    %v1204 = vmax.f32 %v1198, %v1200
    %v1205 = vmax.f32 %v1201, %v1195
    %v1206 = vmax.f32 %v1202, %v1196
    %v1207 = vmax.f32 %v1203, %v1205
    %v1208 = vmax.f32 %v1204, %v1206
    %v1209 = vld [vmem:[%s3] sm:$0x3]
    %v1211 = vlaneseq
    %v1212 = vshrl.u32 %v1211, 7
    %v1213 = vsub.s32 0, %v1212
    %v1214 = vrot.slane %v1209, %v1213
    %v1215 = vlaneseq
    %v1216 = vshrl.u32 %v1215, 7
    %v1217 = vsub.s32 1, %v1216
    %v1218 = vrot.slane %v1209, %v1217
    %v1221 = vadd.f32 %v1207, %v1214
    %v1222 = vadd.f32 %v1208, %v1218
    %v1223 = vmax.f32 %v1221, 0.0
    %v1224 = vmax.f32 %v1222, 0.0
    %v1225 = vpack.c.bf16 %v1223, %v1223
    %v1226 = vpack.c.bf16 %v1224, %v1224
    %v1227 = vld [vmem:[%s4] sm:$0xf]
    %v1228 = vld [vmem:[%s4 + $0x4] sm:$0xf]
    %v1229 = vld [vmem:[%s4 + $0x8] sm:$0xf]
    %v1230 = vld [vmem:[%s4 + $0xc] sm:$0xf]
    %v1231 = vld [vmem:[%s4 + $0x10] sm:$0xf]
    %v1232 = vld [vmem:[%s4 + $0x14] sm:$0xf]
    %v1233 = vld [vmem:[%s4 + $0x18] sm:$0xf]
    %v1234 = vld [vmem:[%s4 + $0x1c] sm:$0xf]
    %v1235 = vld [vmem:[%s4 + $0x20] sm:$0xf]
    %v1236 = vld [vmem:[%s4 + $0x24] sm:$0xf]
    %v1237 = vld [vmem:[%s4 + $0x28] sm:$0xf]
    %v1238 = vld [vmem:[%s4 + $0x2c] sm:$0xf]
    %v1239 = vld [vmem:[%s4 + $0x30] sm:$0xf]
    %v1240 = vld [vmem:[%s4 + $0x34] sm:$0xf]
    %v1241 = vld [vmem:[%s4 + $0x38] sm:$0xf]
    %v1242 = vld [vmem:[%s4 + $0x3c] sm:$0xf]
    %v1243 = vld [vmem:[%s4 + $0x40] sm:$0xf]
    %v1244 = vld [vmem:[%s4 + $0x44] sm:$0xf]
    %v1245 = vld [vmem:[%s4 + $0x48] sm:$0xf]
    %v1246 = vld [vmem:[%s4 + $0x4c] sm:$0xf]
    %v1247 = vld [vmem:[%s4 + $0x50] sm:$0xf]
    %v1248 = vld [vmem:[%s4 + $0x54] sm:$0xf]
    %v1249 = vld [vmem:[%s4 + $0x58] sm:$0xf]
    %v1250 = vld [vmem:[%s4 + $0x5c] sm:$0xf]
    %v1251 = vld [vmem:[%s4 + $0x60] sm:$0xf]
    %v1252 = vld [vmem:[%s4 + $0x64] sm:$0xf]
    %v1253 = vld [vmem:[%s4 + $0x68] sm:$0xf]
    %v1254 = vld [vmem:[%s4 + $0x6c] sm:$0xf]
    %v1255 = vld [vmem:[%s4 + $0x70] sm:$0xf]
    %v1256 = vld [vmem:[%s4 + $0x74] sm:$0xf]
    %v1257 = vld [vmem:[%s4 + $0x78] sm:$0xf]
    %v1258 = vld [vmem:[%s4 + $0x7c] sm:$0xf]
    %v1259 = vld [vmem:[%s5] sm:$0x1]
    %v1261 = vlaneseq
    %v1262 = vshrl.u32 %v1261, 7
    %v1263 = vsub.s32 0, %v1262
    %v1264 = vrot.slane %v1259, %v1263
    %v1298 = vunpack.c.l.b16 %v1227
    %v1299 = vunpack.c.l.b16 %v1228
    %v1300 = vunpack.c.l.b16 %v1229
    %v1301 = vunpack.c.l.b16 %v1230
    %v1302 = vunpack.c.l.b16 %v1231
    %v1303 = vunpack.c.l.b16 %v1232
    %v1304 = vunpack.c.l.b16 %v1233
    %v1305 = vunpack.c.l.b16 %v1234
    %v1306 = vunpack.c.l.b16 %v1235
    %v1307 = vunpack.c.l.b16 %v1236
    %v1308 = vunpack.c.l.b16 %v1237
    %v1309 = vunpack.c.l.b16 %v1238
    %v1310 = vunpack.c.l.b16 %v1239
    %v1311 = vunpack.c.l.b16 %v1240
    %v1312 = vunpack.c.l.b16 %v1241
    %v1313 = vunpack.c.l.b16 %v1242
    %v1314 = vunpack.c.l.b16 %v1243
    %v1315 = vunpack.c.l.b16 %v1244
    %v1316 = vunpack.c.l.b16 %v1245
    %v1317 = vunpack.c.l.b16 %v1246
    %v1318 = vunpack.c.l.b16 %v1247
    %v1319 = vunpack.c.l.b16 %v1248
    %v1320 = vunpack.c.l.b16 %v1249
    %v1321 = vunpack.c.l.b16 %v1250
    %v1322 = vunpack.c.l.b16 %v1251
    %v1323 = vunpack.c.l.b16 %v1252
    %v1324 = vunpack.c.l.b16 %v1253
    %v1325 = vunpack.c.l.b16 %v1254
    %v1326 = vunpack.c.l.b16 %v1255
    %v1327 = vunpack.c.l.b16 %v1256
    %v1328 = vunpack.c.l.b16 %v1257
    %v1329 = vunpack.c.l.b16 %v1258
    %v1330 = vpack.c.b16 %v1299, %v1298
    %v1331 = vpack.c.b16 %v1301, %v1300
    %v1332 = vpack.c.b16 %v1303, %v1302
    %v1333 = vpack.c.b16 %v1305, %v1304
    %v1334 = vpack.c.b16 %v1307, %v1306
    %v1335 = vpack.c.b16 %v1309, %v1308
    %v1336 = vpack.c.b16 %v1311, %v1310
    %v1337 = vpack.c.b16 %v1313, %v1312
    %v1338 = vpack.c.b16 %v1315, %v1314
    %v1339 = vpack.c.b16 %v1317, %v1316
    %v1340 = vpack.c.b16 %v1319, %v1318
    %v1341 = vpack.c.b16 %v1321, %v1320
    %v1342 = vpack.c.b16 %v1323, %v1322
    %v1343 = vpack.c.b16 %v1325, %v1324
    %v1344 = vpack.c.b16 %v1327, %v1326
    %v1345 = vpack.c.b16 %v1329, %v1328
    %1362 = vmatprep.subr.bf16.mxu0 0
    %1363 = vmatpush1.bf16.msra.mxu0 %v1330
    %1364 = vmatprep.subr.bf16.mxu0 0
    %1365 = vmatpush1.bf16.msra.mxu0 %v1331
    %1366 = vmatprep.subr.bf16.mxu0 0
    %1367 = vmatpush1.bf16.msra.mxu0 %v1332
    %1368 = vmatprep.subr.bf16.mxu0 0
    %1369 = vmatpush1.bf16.msra.mxu0 %v1333
    %1370 = vmatprep.subr.bf16.mxu0 0
    %1371 = vmatpush1.bf16.msra.mxu0 %v1334
    %1372 = vmatprep.subr.bf16.mxu0 0
    %1373 = vmatpush1.bf16.msra.mxu0 %v1335
    %1374 = vmatprep.subr.bf16.mxu0 0
    %1375 = vmatpush1.bf16.msra.mxu0 %v1336
    %1376 = vmatprep.subr.bf16.mxu0 0
    %1377 = vmatpush1.bf16.msra.mxu0 %v1337
    %1378 = vmatprep.subr.bf16.mxu0 0
    %1379 = vmatpush1.bf16.msra.mxu0 %v1338
    %1380 = vmatprep.subr.bf16.mxu0 0
    %1381 = vmatpush1.bf16.msra.mxu0 %v1339
    %1382 = vmatprep.subr.bf16.mxu0 0
    %1383 = vmatpush1.bf16.msra.mxu0 %v1340
    %1384 = vmatprep.subr.bf16.mxu0 0
    %1385 = vmatpush1.bf16.msra.mxu0 %v1341
    %1386 = vmatprep.subr.bf16.mxu0 0
    %1387 = vmatpush1.bf16.msra.mxu0 %v1342
    %1388 = vmatprep.subr.bf16.mxu0 0
    %1389 = vmatpush1.bf16.msra.mxu0 %v1343
    %1390 = vmatprep.subr.bf16.mxu0 0
    %1391 = vmatpush1.bf16.msra.mxu0 %v1344
    %1392 = vmatprep.subr.bf16.mxu0 0
    %1393 = vmatpush1.bf16.msra.mxu0 %v1345
    %1394 = vmatprep.mubr.bf16.mxu0 %v1226
    %1395 = vmatmul.mubr.bf16.gmra.mrb[0].mxu0 %v1225
    %v1396 = vpop.f32.mrb[0].mxu0
    %v1397 = vadd.f32 %v1264, %v1396
    %v1398 = vpop.f32.mrb[0].mxu0
    %v1399 = vpop.f32.mrb[0].mxu0
    %v1400 = vpop.f32.mrb[0].mxu0
    %1401 = vdwg.mxu0
    %1402 = vst [vmem:[%s6] sm:$0xff] %v1397
    // Predicated region
    $region34: #{textcnn_forward.1} parent=1 // pred_check
      _
    $region35: #{textcnn_forward.1} parent=1 // pred_check_branch
      %1404 = sbr.rel (0) target = $region37
    $region36: #{textcnn_forward.1} parent=1 // pred_region
      _
    $region37: #{textcnn_forward.1} parent=1 // pred_fallthru
      _
    // Predicated region
    $region38: #{textcnn_forward.1} parent=1 // pred_check
      _
    $region39: #{textcnn_forward.1} parent=1 // pred_check_branch
      %1406 = sbr.rel (0) target = $region41
    $region40: #{textcnn_forward.1} parent=1 // pred_region
      _
    $region41: #{textcnn_forward.1} parent=1 // pred_fallthru
      _
    %1407 = vsyncpa [#allocation3], 1
    %1408 = vsyncpa [#allocation5], 1

</llo_original>
